<compile_context>
chip_gen: v5e
topology: v5e:2x2
jax: 0.10.0
libtpu: 0.0.40
codegen_flags: <defaults>
</compile_context>

<pallas_src>
import jax
import jax.numpy as jnp
import numpy as np
from jax import lax
from jax.experimental import pallas as pl
from jax.experimental.pallas import tpu as pltpu


def _make_kernel(batch_block, N, H, use_tanh, C):
    # dot_general dims: contract last dim of lhs with last dim of rhs (A @ B^T).
    DN = (((1,), (1,)), ((), ()))
    f32 = jnp.float32

    def kernel(h_ref, gru_ref, wq_ref, bq_ref, wk_ref, bk_ref, v_ref,
               key_ref, logits_ref):
        # h_ref:      (batch_block*N, H)  batch-major rows: row = b*N + n
        # gru_ref:    (batch_block, H)
        # wq/wk_ref:  (H, H)  raw PyTorch weights (out_features x in_features)
        # bq/bk_ref:  (H, 1);  v_ref: (1, H)
        # key_ref:    (batch_block, H, N)   -- Conv1d-layout key output
        # logits_ref: (batch_block, N)

        # ONE key matmul for the whole tile (bf16 inputs OK; f32 accumulation):
        #   keyT[o, c] = sum_h Wk[o, h] * h[c, h] + bk[o],   column c = b*N + n
        keyT = lax.dot_general(wk_ref[...], h_ref[...], DN,
                               preferred_element_type=f32) + bk_ref[...]
        # ONE query matmul for the whole batch chunk:
        #   qT[o, b] = sum_h Wq[o, h] * gru[b, h] + bq[o]
        qT = lax.dot_general(wq_ref[...], gru_ref[...], DN,
                             preferred_element_type=f32) + bq_ref[...]

        # key output: per-batch static lane slices (columns are already
        # batch-major contiguous -> no de-interleave, no selection matmuls).
        for b in range(batch_block):
            key_ref[b] = keyT[:, b * N:(b + 1) * N].astype(key_ref.dtype)

        # Broadcast query over each batch's node columns, then ONE fused
        # lane-dense tanh over (H, batch_block*N) and ONE (1,H)x(H, *) matmul.
        qb = jnp.concatenate(
            [jnp.broadcast_to(qT[:, b:b + 1], (H, N)) for b in range(batch_block)],
            axis=1)                                            # (H, bb*N)
        t = jnp.tanh(qb + keyT)                                # (H, bb*N), f32
        u = jnp.dot(v_ref[...].astype(f32), t,
                    preferred_element_type=f32)                # (1, bb*N)
        logits = jnp.concatenate(
            [u[:, b * N:(b + 1) * N] for b in range(batch_block)], axis=0)
        if use_tanh:
            logits = C * jnp.tanh(logits)
        logits_ref[...] = logits.astype(logits_ref.dtype)      # single store

    return kernel


def attention_decoder_forward(h_n, gru_hidden, params, use_tanh=False, C=10.0,
                              batch_block=None, matmul_dtype=jnp.float32):
    """
    h_n:        (N, B, H) float32
    gru_hidden: (B, H)    float32
    params: dict with Wq (H,H), bq (H,), Wk (H,H), bk (H,), v (H,)
    returns: key (B, H, N), logits (B, N) -- same as the PyTorch module.
    matmul_dtype: jnp.float32 (exact) or jnp.bfloat16 (MXU-native inputs,
                  f32 accumulation).
    """
    N, B, H = h_n.shape
    if batch_block is None:
        batch_block = B   # single step; on v7x choose batch_block <= B//2 (mult of 8)
    assert B % batch_block == 0
    if batch_block != B:
        # (8,128) block constraints for the batch-tiled path; also keeps gru /
        # logits sublane blocks unmasked.
        assert batch_block % 8 == 0, "batch_block must be a multiple of 8 when < B"
    steps = B // batch_block

    md = jnp.dtype(matmul_dtype)
    isz = md.itemsize

    # Batch-major contiguous layout: row = b*N + n.  One HBM pass in the wrapper
    # removes all in-kernel de-interleave work.
    h_bm = jnp.transpose(h_n, (1, 0, 2)).reshape(B * N, H).astype(md)
    gru_in = gru_hidden.astype(md)
    wq = params["Wq"].astype(md)
    wk = params["Wk"].astype(md)
    bq_col = params["bq"].reshape(H, 1).astype(jnp.float32)
    bk_col = params["bk"].reshape(H, 1).astype(jnp.float32)
    v_row = params["v"].reshape(1, H).astype(jnp.float32)

    kernel = _make_kernel(batch_block, N, H, use_tanh, C)

    # Cost estimate (selection-matmul term removed).
    flops = 2 * H * H * B * N + 2 * H * H * B + 2 * H * B * N
    transcendentals = B * N * H + (B * N if use_tanh else 0)
    bytes_accessed = (B * N * H * isz + B * H * isz + 2 * H * H * isz
                      + 3 * H * 4 + B * H * N * 4 + B * N * 4)

    # Per-step VMEM residency estimate (double-buffered I/O + f32 temporaries);
    # clamped to v7x's 64 MiB physical VMEM.
    per_step = (2 * batch_block * N * H * isz          # h tile (double-buffered)
                + 2 * batch_block * H * N * 4          # key output tile
                + 2 * batch_block * N * 4              # logits tile
                + 2 * batch_block * H * isz            # gru tile
                + 2 * (2 * H * H * isz + 3 * H * 4)    # weights / biases / v
                + 4 * batch_block * N * H * 4)         # keyT / qb / t temporaries
    vmem_limit = int(min(max(2 * per_step, 16 * 2 ** 20), 64 * 2 ** 20))

    key_out, logits = pl.pallas_call(
        kernel,
        out_shape=(
            jax.ShapeDtypeStruct((B, H, N), jnp.float32),   # key, Conv1d layout
            jax.ShapeDtypeStruct((B, N), jnp.float32),      # logits
        ),
        grid_spec=pltpu.PrefetchScalarGridSpec(
            num_scalar_prefetch=0,
            grid=(steps,),
            in_specs=[
                pl.BlockSpec((batch_block * N, H), lambda i: (i, 0)),  # h (batch-major)
                pl.BlockSpec((batch_block, H), lambda i: (i, 0)),      # gru
                pl.BlockSpec((H, H), lambda i: (0, 0)),                # Wq
                pl.BlockSpec((H, 1), lambda i: (0, 0)),                # bq (col)
                pl.BlockSpec((H, H), lambda i: (0, 0)),                # Wk
                pl.BlockSpec((H, 1), lambda i: (0, 0)),                # bk (col)
                pl.BlockSpec((1, H), lambda i: (0, 0)),                # v  (row)
            ],
            out_specs=[
                pl.BlockSpec((batch_block, H, N), lambda i: (i, 0, 0)),  # key
                pl.BlockSpec((batch_block, N), lambda i: (i, 0)),        # logits
            ],
        ),
        compiler_params=pltpu.CompilerParams(
            dimension_semantics=("parallel",),
            vmem_limit_bytes=vmem_limit),
        cost_estimate=pl.CostEstimate(flops=flops,
                                      transcendentals=transcendentals,
                                      bytes_accessed=bytes_accessed),
    )(h_bm, gru_in, wq, bq_col, wk, bk_col, v_row)

    return key_out, logits


def _reference_forward(h_n, gru_hidden, params, use_tanh=False, C=10.0,
                       matmul_dtype=jnp.float32):
    """Pure-JAX reference mirroring the PyTorch code (optionally with the same
    bf16 input rounding as the kernel's matmul_dtype path)."""
    md = jnp.dtype(matmul_dtype)
    Wq = params["Wq"].astype(md)
    Wk = params["Wk"].astype(md)
    g = gru_hidden.astype(md)
    h = h_n.astype(md)
    h_bhn = jnp.transpose(h, (1, 2, 0))                                   # (B, H, N)
    query = jnp.einsum("bh,oh->bo", g, Wq,
                       preferred_element_type=jnp.float32) + params["bq"]  # (B, H)
    key = jnp.einsum("oh,bhn->bon", Wk, h_bhn,
                     preferred_element_type=jnp.float32) + params["bk"][None, :, None]
    t = jnp.tanh(query[:, :, None] + key)                                 # (B, H, N)
    u = jnp.einsum("h,bhn->bn", params["v"], t,
                   preferred_element_type=jnp.float32)                    # (B, N)
    logits = C * jnp.tanh(u) if use_tanh else u
    return key, logits


def init_params(hidden_dim, seed=0):
    k = jax.random.PRNGKey(seed)
    k1, k2, k3, k4, k5 = jax.random.split(k, 5)
    bound = 1.0 / np.sqrt(hidden_dim)
    return {
        "Wq": jax.random.uniform(k1, (hidden_dim, hidden_dim), jnp.float32, -bound, bound),
        "bq": jax.random.uniform(k2, (hidden_dim,), jnp.float32, -bound, bound),
        # Conv1d(H, H, 1) weight is (H, H, 1) in torch; kernel-size-1 squeezed to (H, H).
        "Wk": jax.random.uniform(k3, (hidden_dim, hidden_dim), jnp.float32, -bound, bound),
        "bk": jax.random.uniform(k4, (hidden_dim,), jnp.float32, -bound, bound),
        "v": jax.random.uniform(k5, (hidden_dim,), jnp.float32, -0.08, 0.08),
    }


if __name__ == "__main__":
    hidden_dim = 32
    batch = 2
    node_num = 8

    params = init_params(hidden_dim, seed=0)

    key0 = jax.random.PRNGKey(0)
    kh, kg = jax.random.split(key0)
    h_n = jax.random.normal(kh, (node_num, batch, hidden_dim), jnp.float32)
    gru_hidden = jax.random.normal(kg, (batch, hidden_dim), jnp.float32)

    # --- exact f32 path, use_tanh=False (module default) ---
    key_out, logits_out = attention_decoder_forward(h_n, gru_hidden, params, use_tanh=False)
    key_out = jax.block_until_ready(key_out)
    logits_out = jax.block_until_ready(logits_out)
    key_ref, logits_ref = _reference_forward(h_n, gru_hidden, params, use_tanh=False)
    assert key_out.shape == (batch, hidden_dim, node_num)
    assert logits_out.shape == (batch, node_num)
    np.testing.assert_allclose(np.asarray(key_out), np.asarray(key_ref), rtol=1e-5, atol=1e-5)
    np.testing.assert_allclose(np.asarray(logits_out), np.asarray(logits_ref), rtol=1e-5, atol=1e-5)

    # --- exact f32 path, use_tanh=True (C * tanh(u)) ---
    _, logits_t = attention_decoder_forward(h_n, gru_hidden, params, use_tanh=True)
    logits_t = jax.block_until_ready(logits_t)
    _, logits_t_ref = _reference_forward(h_n, gru_hidden, params, use_tanh=True)
    np.testing.assert_allclose(np.asarray(logits_t), np.asarray(logits_t_ref), rtol=1e-5, atol=1e-4)

    # --- bf16 MXU-input path (f32 accumulation / f32 tanh), checked against a
    #     reference with identical bf16 input rounding ---
    key_bf, logits_bf = attention_decoder_forward(h_n, gru_hidden, params, use_tanh=False,
                                                  matmul_dtype=jnp.bfloat16)
    key_bf = jax.block_until_ready(key_bf)
    logits_bf = jax.block_until_ready(logits_bf)
    key_bf_ref, logits_bf_ref = _reference_forward(h_n, gru_hidden, params, use_tanh=False,
                                                   matmul_dtype=jnp.bfloat16)
    np.testing.assert_allclose(np.asarray(key_bf), np.asarray(key_bf_ref), rtol=2e-3, atol=2e-3)
    np.testing.assert_allclose(np.asarray(logits_bf), np.asarray(logits_bf_ref), rtol=2e-3, atol=2e-3)

    print("KERNEL_OK")
</pallas_src>

<mosaic_0001>
module attributes {stable_mosaic.version = 11 : i64} {
  func.func @kernel(%arg0: i32, %arg1: memref<16x32xf32, #tpu.memory_space<vmem>>, %arg2: memref<2x32xf32, #tpu.memory_space<vmem>>, %arg3: memref<32x32xf32, #tpu.memory_space<vmem>>, %arg4: memref<32x1xf32, #tpu.memory_space<vmem>>, %arg5: memref<32x32xf32, #tpu.memory_space<vmem>>, %arg6: memref<32x1xf32, #tpu.memory_space<vmem>>, %arg7: memref<1x32xf32, #tpu.memory_space<vmem>>, %arg8: memref<2x32x8xf32, #tpu.memory_space<vmem>>, %arg9: memref<2x8xf32, #tpu.memory_space<vmem>>) attributes {dimension_semantics = [#tpu.dimension_semantics<parallel>], iteration_bounds = array<i64: 1>, scalar_prefetch = 0 : i64, scratch_operands = 0 : i64, tpu.core_type = #tpu.core_type<tc>, window_params = [{transform_indices = @transform_0, window_bounds = array<i64: 16, 32>}, {transform_indices = @transform_1, window_bounds = array<i64: 2, 32>}, {pipeline_mode = #tpu.pipeline_mode<synchronous>, transform_indices = @transform_2, window_bounds = array<i64: 32, 32>}, {pipeline_mode = #tpu.pipeline_mode<synchronous>, transform_indices = @transform_3, window_bounds = array<i64: 32, 1>}, {pipeline_mode = #tpu.pipeline_mode<synchronous>, transform_indices = @transform_4, window_bounds = array<i64: 32, 32>}, {pipeline_mode = #tpu.pipeline_mode<synchronous>, transform_indices = @transform_5, window_bounds = array<i64: 32, 1>}, {pipeline_mode = #tpu.pipeline_mode<synchronous>, transform_indices = @transform_6, window_bounds = array<i64: 1, 32>}, {transform_indices = @transform_7, window_bounds = array<i64: 2, 32, 8>}, {transform_indices = @transform_8, window_bounds = array<i64: 2, 8>}]} {
    %c0 = arith.constant 0 : index
    %c0_0 = arith.constant 0 : index
    %0 = vector.load %arg5[%c0, %c0_0] : memref<32x32xf32, #tpu.memory_space<vmem>>, vector<32x32xf32>
    %c0_1 = arith.constant 0 : index
    %c0_2 = arith.constant 0 : index
    %1 = vector.load %arg1[%c0_1, %c0_2] : memref<16x32xf32, #tpu.memory_space<vmem>>, vector<16x32xf32>
    %cst = arith.constant dense<0.000000e+00> : vector<32x16xf32>
    %2 = tpu.matmul %0, %1, %cst {dimension_numbers = #tpu.dot_dimension_numbers<[1], [1], [0], [0], [0, 0, 1, 0], [], []>} : vector<32x32xf32>, vector<16x32xf32>, vector<32x16xf32> -> vector<32x16xf32>
    %c0_3 = arith.constant 0 : index
    %c0_4 = arith.constant 0 : index
    %3 = vector.load %arg6[%c0_3, %c0_4] : memref<32x1xf32, #tpu.memory_space<vmem>>, vector<32x1xf32>
    %4 = vector.broadcast %3 : vector<32x1xf32> to vector<32x16xf32>
    %5 = arith.addf %2, %4 : vector<32x16xf32>
    %c0_5 = arith.constant 0 : index
    %c0_6 = arith.constant 0 : index
    %6 = vector.load %arg3[%c0_5, %c0_6] : memref<32x32xf32, #tpu.memory_space<vmem>>, vector<32x32xf32>
    %c0_7 = arith.constant 0 : index
    %c0_8 = arith.constant 0 : index
    %7 = vector.load %arg2[%c0_7, %c0_8] : memref<2x32xf32, #tpu.memory_space<vmem>>, vector<2x32xf32>
    %cst_9 = arith.constant dense<0.000000e+00> : vector<32x2xf32>
    %8 = tpu.matmul %6, %7, %cst_9 {dimension_numbers = #tpu.dot_dimension_numbers<[1], [1], [0], [0], [0, 0, 1, 0], [], []>} : vector<32x32xf32>, vector<2x32xf32>, vector<32x2xf32> -> vector<32x2xf32>
    %c0_10 = arith.constant 0 : index
    %c0_11 = arith.constant 0 : index
    %9 = vector.load %arg4[%c0_10, %c0_11] : memref<32x1xf32, #tpu.memory_space<vmem>>, vector<32x1xf32>
    %10 = vector.broadcast %9 : vector<32x1xf32> to vector<32x2xf32>
    %11 = arith.addf %8, %10 : vector<32x2xf32>
    %12 = vector.extract_strided_slice %5 {offsets = [0, 0], sizes = [32, 8], strides = [1, 1]} : vector<32x16xf32> to vector<32x8xf32>
    %c0_12 = arith.constant 0 : index
    %c0_13 = arith.constant 0 : index
    %c0_14 = arith.constant 0 : index
    %13 = vector.load %arg8[%c0_12, %c0_13, %c0_14] : memref<2x32x8xf32, #tpu.memory_space<vmem>>, vector<1x32x8xf32>
    %14 = vector.shape_cast %13 : vector<1x32x8xf32> to vector<32x8xf32>
    %15 = vector.shape_cast %12 : vector<32x8xf32> to vector<1x32x8xf32>
    tpu.vector_store %arg8[%c0_12, %c0_13, %c0_14], %15 {strides = array<i32>} : memref<2x32x8xf32, #tpu.memory_space<vmem>>, vector<1x32x8xf32>,
    %16 = vector.extract_strided_slice %5 {offsets = [0, 8], sizes = [32, 8], strides = [1, 1]} : vector<32x16xf32> to vector<32x8xf32>
    %c1 = arith.constant 1 : index
    %c0_15 = arith.constant 0 : index
    %c0_16 = arith.constant 0 : index
    %17 = vector.load %arg8[%c1, %c0_15, %c0_16] : memref<2x32x8xf32, #tpu.memory_space<vmem>>, vector<1x32x8xf32>
    %18 = vector.shape_cast %17 : vector<1x32x8xf32> to vector<32x8xf32>
    %19 = vector.shape_cast %16 : vector<32x8xf32> to vector<1x32x8xf32>
    tpu.vector_store %arg8[%c1, %c0_15, %c0_16], %19 {strides = array<i32>} : memref<2x32x8xf32, #tpu.memory_space<vmem>>, vector<1x32x8xf32>,
    %20 = vector.extract_strided_slice %11 {offsets = [0, 0], sizes = [32, 1], strides = [1, 1]} : vector<32x2xf32> to vector<32x1xf32>
    %21 = vector.shape_cast %20 : vector<32x1xf32> to vector<32x1xf32>
    %22 = vector.broadcast %21 : vector<32x1xf32> to vector<32x8xf32>
    %23 = vector.extract_strided_slice %11 {offsets = [0, 1], sizes = [32, 1], strides = [1, 1]} : vector<32x2xf32> to vector<32x1xf32>
    %24 = vector.shape_cast %23 : vector<32x1xf32> to vector<32x1xf32>
    %25 = vector.broadcast %24 : vector<32x1xf32> to vector<32x8xf32>
    %26 = tpu.concatenate %22, %25 in 1 : vector<32x8xf32>, vector<32x8xf32> -> vector<32x16xf32>
    %27 = arith.addf %26, %5 : vector<32x16xf32>
    %28 = math.tanh %27 : vector<32x16xf32>
    %c0_17 = arith.constant 0 : index
    %c0_18 = arith.constant 0 : index
    %29 = vector.load %arg7[%c0_17, %c0_18] : memref<1x32xf32, #tpu.memory_space<vmem>>, vector<1x32xf32>
    %cst_19 = arith.constant dense<0.000000e+00> : vector<1x16xf32>
    %30 = tpu.matmul %29, %28, %cst_19 {dimension_numbers = #tpu.dot_dimension_numbers<[1], [0], [0], [1], [0, 0, 1, 1], [], []>} : vector<1x32xf32>, vector<32x16xf32>, vector<1x16xf32> -> vector<1x16xf32>
    %31 = vector.extract_strided_slice %30 {offsets = [0, 0], sizes = [1, 8], strides = [1, 1]} : vector<1x16xf32> to vector<1x8xf32>
    %32 = vector.extract_strided_slice %30 {offsets = [0, 8], sizes = [1, 8], strides = [1, 1]} : vector<1x16xf32> to vector<1x8xf32>
    %33 = tpu.concatenate %31, %32 in 0 : vector<1x8xf32>, vector<1x8xf32> -> vector<2x8xf32>
    %c0_20 = arith.constant 0 : index
    %c0_21 = arith.constant 0 : index
    %34 = vector.load %arg9[%c0_20, %c0_21] : memref<2x8xf32, #tpu.memory_space<vmem>>, vector<2x8xf32>
    tpu.vector_store %arg9[%c0_20, %c0_21], %33 {strides = array<i32>} : memref<2x8xf32, #tpu.memory_space<vmem>>, vector<2x8xf32>,
    return
  }
  func.func @transform_0(%arg0: i32) -> (i32, i32) {
    %c0_i32 = arith.constant 0 : i32
    %c0_i32_0 = arith.constant 0 : i32
    return %arg0, %c0_i32 : i32, i32
  }
  func.func @transform_1(%arg0: i32) -> (i32, i32) {
    %c0_i32 = arith.constant 0 : i32
    %c0_i32_0 = arith.constant 0 : i32
    return %arg0, %c0_i32 : i32, i32
  }
  func.func @transform_2(%arg0: i32) -> (i32, i32) {
    %c0_i32 = arith.constant 0 : i32
    %c0_i32_0 = arith.constant 0 : i32
    %c0_i32_1 = arith.constant 0 : i32
    return %c0_i32, %c0_i32_0 : i32, i32
  }
  func.func @transform_3(%arg0: i32) -> (i32, i32) {
    %c0_i32 = arith.constant 0 : i32
    %c0_i32_0 = arith.constant 0 : i32
    %c0_i32_1 = arith.constant 0 : i32
    return %c0_i32, %c0_i32_0 : i32, i32
  }
  func.func @transform_4(%arg0: i32) -> (i32, i32) {
    %c0_i32 = arith.constant 0 : i32
    %c0_i32_0 = arith.constant 0 : i32
    %c0_i32_1 = arith.constant 0 : i32
    return %c0_i32, %c0_i32_0 : i32, i32
  }
  func.func @transform_5(%arg0: i32) -> (i32, i32) {
    %c0_i32 = arith.constant 0 : i32
    %c0_i32_0 = arith.constant 0 : i32
    %c0_i32_1 = arith.constant 0 : i32
    return %c0_i32, %c0_i32_0 : i32, i32
  }
  func.func @transform_6(%arg0: i32) -> (i32, i32) {
    %c0_i32 = arith.constant 0 : i32
    %c0_i32_0 = arith.constant 0 : i32
    %c0_i32_1 = arith.constant 0 : i32
    return %c0_i32, %c0_i32_0 : i32, i32
  }
  func.func @transform_7(%arg0: i32) -> (i32, i32, i32) {
    %c0_i32 = arith.constant 0 : i32
    %c0_i32_0 = arith.constant 0 : i32
    %c0_i32_1 = arith.constant 0 : i32
    return %arg0, %c0_i32, %c0_i32_0 : i32, i32, i32
  }
  func.func @transform_8(%arg0: i32) -> (i32, i32) {
    %c0_i32 = arith.constant 0 : i32
    %c0_i32_0 = arith.constant 0 : i32
    return %arg0, %c0_i32 : i32, i32
  }
}

</mosaic_0001>

<llo_original>
// kernel: tpu_custom_call.1
$region0: #{tpu_custom_call.1}
  #allocation0 [shape = 'u32[]', space=smem, size = 0x4, offset = 0x4, fixed_abs, tag = 'smem constant byte address 0x4 - core index']
  #allocation1 [shape = 'u32[72,128]{1,0:T(1,128)}', space=vmem, size = 0x9000, scoped, tag = 'internal scratch']
  %s0 = inlined_call_operand.hbm [shape: f32[16,32], index: 0, kind: input, shape index: {}]
  %s1 = inlined_call_operand.vmem [shape: f32[2,32], index: 1, kind: input, shape index: {}]
  %s2 = inlined_call_operand.vmem [shape: f32[32,32], index: 2, kind: input, shape index: {}]
  %s3 = inlined_call_operand.vmem [shape: f32[32,1], index: 3, kind: input, shape index: {}]
  %s4 = inlined_call_operand.vmem [shape: f32[32,32], index: 4, kind: input, shape index: {}]
  %s5 = inlined_call_operand.vmem [shape: f32[32,1], index: 5, kind: input, shape index: {}]
  %s6 = inlined_call_operand.vmem [shape: f32[1,32], index: 6, kind: input, shape index: {}]
  %s7 = inlined_call_operand.vmem [shape: f32[2,32,8], index: 7, kind: output, shape index: {0}]
  %s8 = inlined_call_operand.hbm [shape: f32[2,8], index: 8, kind: output, shape index: {1}]
  %9 = xla_tuple %s7, %s8
  %s10 = sld [smem:[#allocation0]]
  $region50: #{tpu_custom_call.1} parent=0
    _
  %s12 = ssub.s32 1, %s10
  %s13 = scalar_select 0, %s12, %s10
  $region1: #{tpu_custom_call.1} parent=0
    #allocation2 [shape = 'u8[8192]{0}', space=vmem, size = 0x2000, scoped, tag = 'input window, operand 0, single buffered']
    #allocation3 [shape = 's32[1]{0}', space=sflag, size = 0x4, scoped, tag = 'scoped memory for tpu_custom_call.1']
    #allocation4 [shape = 's32[1]{0}', space=sflag, size = 0x4, scoped, tag = 'scoped memory for tpu_custom_call.1']
    #allocation5 [shape = 'u8[1024]{0}', space=vmem, size = 0x400, scoped, tag = 'output window, operand 1, single buffered']
    %14 = vsyncpa [#allocation3], 0
    %15 = vsyncpa [#allocation4], 0
    // Predicated region
    $region2: #{tpu_custom_call.1} parent=1 // pred_check
      _
    $region3: #{tpu_custom_call.1} parent=1 // pred_check_branch
      %17 = sbr.rel (0) target = $region5
    $region4: #{tpu_custom_call.1} parent=1 // pred_region
      %19 = vsyncadd [#allocation3], 0
      %s20 = sshll.u32 %s0, 4
      %s21 = int_to_ptr.hbm [resolvable:$true] %s20
      %s22 = sshll.u32 [#allocation2], 4
      %s23 = int_to_ptr.vmem [resolvable:$true] %s22
      %28 = dma.hbm_to_vmem [thread:$0]  %s21, 256, %s23, [#allocation3], 128, 128, 8
    $region5: #{tpu_custom_call.1} parent=1 // pred_fallthru
      _
    // Predicated region
    $region6: #{tpu_custom_call.1} parent=1 // pred_check
      _
    $region7: #{tpu_custom_call.1} parent=1 // pred_check_branch
      %30 = sbr.rel (0) target = $region9
    $region8: #{tpu_custom_call.1} parent=1 // pred_region
      _
    $region9: #{tpu_custom_call.1} parent=1 // pred_fallthru
      _
    // Predicated region
    $region10: #{tpu_custom_call.1} parent=1 // pred_check
      _
    $region11: #{tpu_custom_call.1} parent=1 // pred_check_branch
      %32 = sbr.rel (0) target = $region13
    $region12: #{tpu_custom_call.1} parent=1 // pred_region
      _
    $region13: #{tpu_custom_call.1} parent=1 // pred_fallthru
      _
    // Predicated region
    $region14: #{tpu_custom_call.1} parent=1 // pred_check
      _
    $region15: #{tpu_custom_call.1} parent=1 // pred_check_branch
      %34 = sbr.rel (0) target = $region17
    $region16: #{tpu_custom_call.1} parent=1 // pred_region
      _
    $region17: #{tpu_custom_call.1} parent=1 // pred_fallthru
      _
    // Predicated region
    $region18: #{tpu_custom_call.1} parent=1 // pred_check
      _
    $region19: #{tpu_custom_call.1} parent=1 // pred_check_branch
      %36 = sbr.rel (0) target = $region21
    $region20: #{tpu_custom_call.1} parent=1 // pred_region
      _
    $region21: #{tpu_custom_call.1} parent=1 // pred_fallthru
      _
    // Predicated region
    $region22: #{tpu_custom_call.1} parent=1 // pred_check
      _
    $region23: #{tpu_custom_call.1} parent=1 // pred_check_branch
      %38 = sbr.rel (0) target = $region25
    $region24: #{tpu_custom_call.1} parent=1 // pred_region
      _
    $region25: #{tpu_custom_call.1} parent=1 // pred_fallthru
      _
    // Predicated region
    $region26: #{tpu_custom_call.1} parent=1 // pred_check
      _
    $region27: #{tpu_custom_call.1} parent=1 // pred_check_branch
      %40 = sbr.rel (0) target = $region29
    $region28: #{tpu_custom_call.1} parent=1 // pred_region
      _
    $region29: #{tpu_custom_call.1} parent=1 // pred_fallthru
      _
    // Predicated region
    $region30: #{tpu_custom_call.1} parent=1 // pred_check
      _
    $region31: #{tpu_custom_call.1} parent=1 // pred_check_branch
      %42 = sbr.rel (0) target = $region33
    $region32: #{tpu_custom_call.1} parent=1 // pred_region
      %44 = dma.done [#allocation3], 256
    $region33: #{tpu_custom_call.1} parent=1 // pred_fallthru
      _
    %v45 = vld [vmem:[%s4] sm:$0xff]
    %v46 = vld [vmem:[%s4 + $0x8] sm:$0xff]
    %v47 = vld [vmem:[%s4 + $0x10] sm:$0xff]
    %v48 = vld [vmem:[%s4 + $0x18] sm:$0xff]
    %v49 = vld [vmem:[#allocation2] sm:$0xff]
    %v50 = vld [vmem:[#allocation2 + $0x8] sm:$0xff]
    %v51 = vld [vmem:[%s5] sm:$0xff]
    %v52 = vld [vmem:[%s5 + $0x8] sm:$0xff]
    %v53 = vld [vmem:[%s5 + $0x10] sm:$0xff]
    %v54 = vld [vmem:[%s5 + $0x18] sm:$0xff]
    %56 = vset.pattern.permute.xlu0 0
    %57 = vperm.xlu0 %56, %v51
    %v58 = vpop.permute.xlu0 %57
    %61 = vset.pattern.permute.xlu0 0
    %62 = vperm.xlu0 %61, %v52
    %v63 = vpop.permute.xlu0 %62
    %66 = vset.pattern.permute.xlu0 0
    %67 = vperm.xlu0 %66, %v53
    %v68 = vpop.permute.xlu0 %67
    %71 = vset.pattern.permute.xlu0 0
    %72 = vperm.xlu0 %71, %v54
    %v73 = vpop.permute.xlu0 %72
    %vm75 = vcmask 261120
    %v77 = vsel %vm75, %v45, 0
    %v80 = vsel %vm75, %v46, 0
    %v83 = vsel %vm75, %v47, 0
    %v86 = vsel %vm75, %v48, 0
    %v89 = vsel %vm75, %v49, 0
    %v92 = vsel %vm75, %v50, 0
    %94 = vmatpush.xpose.msra.mxu0 0.0
    %95 = vmatpush.xpose.msra.mxu0 0.0
    %96 = vmatpush.xpose.msra.mxu0 0.0
    %97 = vmatpush.xpose.msra.mxu0 0.0
    %98 = vmatpush.xpose.msra.mxu0 0.0
    %99 = vmatpush.xpose.msra.mxu0 0.0
    %100 = vmatpush.xpose.msra.mxu0 0.0
    %101 = vmatpush.xpose.msra.mxu0 0.0
    %102 = vmatpush.xpose.msra.mxu0 0.0
    %103 = vmatpush.xpose.msra.mxu0 0.0
    %104 = vmatpush.xpose.msra.mxu0 0.0
    %105 = vmatpush.xpose.msra.mxu0 0.0
    %106 = vmatpush.xpose.msra.mxu0 0.0
    %107 = vmatpush.xpose.msra.mxu0 0.0
    %108 = vmatpush.xpose.msra.mxu0 %v92
    %109 = vmatpush.xpose.msra.mxu0 %v89
    %110 = vmatmul.f32.gmra.mxu0 %v77
    %v111 = vpop.f32.mrf.mxu0
    %v112 = vadd.f32 %v58, %v111
    %113 = vmatmul.f32.gmra.mxu0 %v80
    %v114 = vpop.f32.mrf.mxu0
    %v115 = vadd.f32 %v63, %v114
    %116 = vmatmul.f32.gmra.mxu0 %v83
    %v117 = vpop.f32.mrf.mxu0
    %v118 = vadd.f32 %v68, %v117
    %119 = vmatmul.f32.gmra.mxu0 %v86
    %v120 = vpop.f32.mrf.mxu0
    %v121 = vadd.f32 %v73, %v120
    %122 = vdwg.mxu0
    %v123 = vld [vmem:[%s2] sm:$0xff]
    %v124 = vld [vmem:[%s2 + $0x8] sm:$0xff]
    %v125 = vld [vmem:[%s2 + $0x10] sm:$0xff]
    %v126 = vld [vmem:[%s2 + $0x18] sm:$0xff]
    %v127 = vld [vmem:[%s1] sm:$0x3]
    %v128 = vld [vmem:[%s3] sm:$0xff]
    %v129 = vld [vmem:[%s3 + $0x8] sm:$0xff]
    %v130 = vld [vmem:[%s3 + $0x10] sm:$0xff]
    %v131 = vld [vmem:[%s3 + $0x18] sm:$0xff]
    %133 = vset.pattern.permute.xlu0 0
    %134 = vperm.xlu0 %133, %v128
    %v135 = vpop.permute.xlu0 %134
    %138 = vset.pattern.permute.xlu0 0
    %139 = vperm.xlu0 %138, %v129
    %v140 = vpop.permute.xlu0 %139
    %143 = vset.pattern.permute.xlu0 0
    %144 = vperm.xlu0 %143, %v130
    %v145 = vpop.permute.xlu0 %144
    %148 = vset.pattern.permute.xlu0 0
    %149 = vperm.xlu0 %148, %v131
    %v150 = vpop.permute.xlu0 %149
    %v153 = vsel %vm75, %v123, 0
    %v156 = vsel %vm75, %v124, 0
    %v159 = vsel %vm75, %v125, 0
    %v162 = vsel %vm75, %v126, 0
    %v165 = vsel %vm75, %v127, 0
    %167 = vmatpush.xpose.msra.mxu0 0.0
    %168 = vmatpush.xpose.msra.mxu0 0.0
    %169 = vmatpush.xpose.msra.mxu0 0.0
    %170 = vmatpush.xpose.msra.mxu0 0.0
    %171 = vmatpush.xpose.msra.mxu0 0.0
    %172 = vmatpush.xpose.msra.mxu0 0.0
    %173 = vmatpush.xpose.msra.mxu0 0.0
    %174 = vmatpush.xpose.msra.mxu0 0.0
    %175 = vmatpush.xpose.msra.mxu0 0.0
    %176 = vmatpush.xpose.msra.mxu0 0.0
    %177 = vmatpush.xpose.msra.mxu0 0.0
    %178 = vmatpush.xpose.msra.mxu0 0.0
    %179 = vmatpush.xpose.msra.mxu0 0.0
    %180 = vmatpush.xpose.msra.mxu0 0.0
    %181 = vmatpush.xpose.msra.mxu0 0.0
    %182 = vmatpush.xpose.msra.mxu0 %v165
    %183 = vmatmul.f32.gmra.mxu0 %v153
    %v184 = vpop.f32.mrf.mxu0
    %v185 = vadd.f32 %v135, %v184
    %186 = vmatmul.f32.gmra.mxu0 %v156
    %v187 = vpop.f32.mrf.mxu0
    %v188 = vadd.f32 %v140, %v187
    %189 = vmatmul.f32.gmra.mxu0 %v159
    %v190 = vpop.f32.mrf.mxu0
    %v191 = vadd.f32 %v145, %v190
    %192 = vmatmul.f32.gmra.mxu0 %v162
    %v193 = vpop.f32.mrf.mxu0
    %v194 = vadd.f32 %v150, %v193
    %195 = vdwg.mxu0
    %vm196 = vcmask 64512
    %197 = vst.msk [vmem:[%s7] sm:$0xff] %vm196, %v112
    %198 = vst.msk [vmem:[%s7 + $0x8] sm:$0xff] %vm196, %v115
    %199 = vst.msk [vmem:[%s7 + $0x10] sm:$0xff] %vm196, %v118
    %200 = vst.msk [vmem:[%s7 + $0x18] sm:$0xff] %vm196, %v121
    %205 = vrot.lane.b32.xlu0 %v112, 120
    %v206 = vpop.permute.xlu0 %205
    %207 = vrot.lane.b32.xlu0 %v115, 120
    %v208 = vpop.permute.xlu0 %207
    %209 = vrot.lane.b32.xlu0 %v118, 120
    %v210 = vpop.permute.xlu0 %209
    %211 = vrot.lane.b32.xlu0 %v121, 120
    %v212 = vpop.permute.xlu0 %211
    %s217 = scalar_lea.vmem %s7, 32
    %218 = vst.msk [vmem:[%s217] sm:$0xff] %vm196, %v206
    %219 = vst.msk [vmem:[%s217 + $0x8] sm:$0xff] %vm196, %v208
    %220 = vst.msk [vmem:[%s217 + $0x10] sm:$0xff] %vm196, %v210
    %221 = vst.msk [vmem:[%s217 + $0x18] sm:$0xff] %vm196, %v212
    %223 = vset.pattern.permute.xlu0 0
    %224 = vperm.xlu0 %223, %v185
    %v225 = vpop.permute.xlu0 %224
    %228 = vset.pattern.permute.xlu0 0
    %229 = vperm.xlu0 %228, %v188
    %v230 = vpop.permute.xlu0 %229
    %233 = vset.pattern.permute.xlu0 0
    %234 = vperm.xlu0 %233, %v191
    %v235 = vpop.permute.xlu0 %234
    %238 = vset.pattern.permute.xlu0 0
    %239 = vperm.xlu0 %238, %v194
    %v240 = vpop.permute.xlu0 %239
    %242 = vset.pattern.permute.xlu0 1
    %243 = vperm.xlu0 %242, %v185
    %v244 = vpop.permute.xlu0 %243
    %246 = vset.pattern.permute.xlu0 1
    %247 = vperm.xlu0 %246, %v188
    %v248 = vpop.permute.xlu0 %247
    %250 = vset.pattern.permute.xlu0 1
    %251 = vperm.xlu0 %250, %v191
    %v252 = vpop.permute.xlu0 %251
    %254 = vset.pattern.permute.xlu0 1
    %255 = vperm.xlu0 %254, %v194
    %v256 = vpop.permute.xlu0 %255
    %v258 = vsel %vm196, %v225, %v244
    %v259 = vsel %vm196, %v230, %v248
    %v260 = vsel %vm196, %v235, %v252
    %v261 = vsel %vm196, %v240, %v256
    %v262 = vadd.f32 %v258, %v112
    %v263 = vadd.f32 %v259, %v115
    %v264 = vadd.f32 %v260, %v118
    %v265 = vadd.f32 %v261, %v121
    %v266 = vtanh.pop %v262
    %v267 = vtanh.pop %v263
    %v268 = vtanh.pop %v264
    %v269 = vtanh.pop %v265
    %v270 = vld [vmem:[%s6] sm:$0x1]
    %v272 = vsel %vm75, %v270, 0
    %274 = vmatpush.msra.mxu0 0.0
    %275 = vmatpush.msra.mxu0 0.0
    %276 = vmatpush.msra.mxu0 0.0
    %277 = vmatpush.msra.mxu0 0.0
    %278 = vmatpush.msra.mxu0 0.0
    %279 = vmatpush.msra.mxu0 0.0
    %280 = vmatpush.msra.mxu0 0.0
    %281 = vmatpush.msra.mxu0 0.0
    %282 = vmatpush.msra.mxu0 0.0
    %283 = vmatpush.msra.mxu0 0.0
    %284 = vmatpush.msra.mxu0 0.0
    %285 = vmatpush.msra.mxu0 0.0
    %286 = vmatpush.msra.mxu0 %v269
    %287 = vmatpush.msra.mxu0 %v268
    %288 = vmatpush.msra.mxu0 %v267
    %289 = vmatpush.msra.mxu0 %v266
    %290 = vmatmul.f32.gmra.mxu0 %v272
    %v291 = vpop.f32.mrf.mxu0
    %v292 = vadd.f32 0.0, %v291
    %293 = vdwg.mxu0
    %v295 = vrot.slane %v292, 7
    %296 = vrot.lane.b32.xlu0 %v295, 120
    %v297 = vpop.permute.xlu0 %296
    %vm299 = vcmask 1040384
    %v300 = vsel %vm299, %v292, %v297
    %vm301 = vcmask 58368
    %302 = vst.msk [vmem:[#allocation5] sm:$0x3] %vm301, %v300
    // Predicated region
    $region34: #{tpu_custom_call.1} parent=1 // pred_check
      _
    $region35: #{tpu_custom_call.1} parent=1 // pred_check_branch
      %304 = sbr.rel (0) target = $region37
    $region36: #{tpu_custom_call.1} parent=1 // pred_region
      _
    $region37: #{tpu_custom_call.1} parent=1 // pred_fallthru
      _
    // Predicated region
    $region38: #{tpu_custom_call.1} parent=1 // pred_check
      _
    $region39: #{tpu_custom_call.1} parent=1 // pred_check_branch
      %306 = sbr.rel (0) target = $region41
    $region40: #{tpu_custom_call.1} parent=1 // pred_region
      %308 = vsyncadd [#allocation4], 0
      %s310 = sshll.u32 [#allocation5], 4
      %s311 = int_to_ptr.vmem [resolvable:$true] %s310
      %s312 = sshll.u32 %s8, 4
      %s313 = int_to_ptr.hbm [resolvable:$true] %s312
      %315 = dma.vmem_to_hbm [thread:$0]  %s311, 32, %s313, [#allocation4]
    $region41: #{tpu_custom_call.1} parent=1 // pred_fallthru
      _
    // Predicated region
    $region42: #{tpu_custom_call.1} parent=1 // pred_check
      _
    $region43: #{tpu_custom_call.1} parent=1 // pred_check_branch
      %317 = sbr.rel (0) target = $region45
    $region44: #{tpu_custom_call.1} parent=1 // pred_region
      _
    $region45: #{tpu_custom_call.1} parent=1 // pred_fallthru
      _
    // Predicated region
    $region46: #{tpu_custom_call.1} parent=1 // pred_check
      _
    $region47: #{tpu_custom_call.1} parent=1 // pred_check_branch
      %319 = sbr.rel (0) target = $region49
    $region48: #{tpu_custom_call.1} parent=1 // pred_region
      %321 = dma.done [#allocation4], 32
    $region49: #{tpu_custom_call.1} parent=1 // pred_fallthru
      _
    %322 = vsyncpa [#allocation3], 1
    %323 = vsyncpa [#allocation4], 1

</llo_original>
